<compile_context>
chip_gen: v6e
topology: v6e:2x2x1
jax: 0.10.0
libtpu: 0.0.40
codegen_flags: <defaults>
</compile_context>

<pallas_src>
import functools
import math

import jax
import jax.numpy as jnp
from jax.experimental import pallas as pl
from jax.experimental.pallas import tpu as pltpu

_NEG_LOG_LABEL_CLIP = -math.log(1e-4)  # -log(clip applied to the one-hot) ~= 9.2103


def _ce_rce_kernel(pred_ref, labels_ref, w_ref, ce_ref, rce_ref, *, n_rows, tn):
    """Per-tile partial sums of the CE and RCE terms for one (TN, C) logit tile."""
    i = pl.program_id(0)
    x = pred_ref[...].astype(jnp.float32)        # (TN, C) logits (bf16 passthrough OK)
    lbl = labels_ref[...]                        # (TN, 1) int32
    w_row = w_ref[...]                           # (1,  C) float32 class weights

    c = x.shape[1]
    ones_c = jnp.ones((c, 1), jnp.float32)       # MXU reduction vector (hoisted constant)

    # Numerically-stable softmax pieces.
    m = jnp.max(x, axis=1, keepdims=True)        # (TN, 1)  XLU
    sh = x - m                                   # (TN, C)
    ex = jnp.exp(sh)                             # (TN, C)  EUP
    # Class-axis sum on the (otherwise idle) MXU instead of the VPU/XLU.
    denom = jnp.dot(ex, ones_c, precision=jax.lax.Precision.HIGHEST,
                    preferred_element_type=jnp.float32)              # (TN, 1)
    inv = 1.0 / denom                            # exact; only TN scalars, so free

    # Label mask: selects only, no float one-hot + multiplies.
    iota = jax.lax.broadcasted_iota(jnp.int32, x.shape, 1)
    mask = iota == lbl                           # (TN, C) bool

    # clamp(softmax, 1e-7, 1) == max(ex, 1e-7*denom) / denom (upper clamp is moot
    # with exact division), and sum_{j != label} p_j in one masked MXU reduction.
    maxed = jnp.maximum(ex, 1e-7 * denom)        # (TN, C)
    off = jnp.where(mask, 0.0, maxed)            # zero out the label column
    p_off = jnp.dot(off, ones_c, precision=jax.lax.Precision.HIGHEST,
                    preferred_element_type=jnp.float32) * inv        # (TN, 1)

    # Label-column gathers via selects + exact f32 lane reductions (XLU slot).
    w_per = jnp.sum(jnp.where(mask, w_row, 0.0), axis=1, keepdims=True)   # w[label]
    sh_lab = jnp.sum(jnp.where(mask, sh, 0.0), axis=1, keepdims=True)     # (x-max)[label]

    logp_lab = sh_lab - jnp.log(denom)           # log_softmax(x)[label]
    ce_row = -(w_per * logp_lab)                                      # (TN, 1)
    rce_row = jnp.float32(_NEG_LOG_LABEL_CLIP) * w_per * p_off        # (TN, 1)

    # Ragged last tile: drop out-of-range rows with a *select* (padding rows can
    # hold NaN/Inf garbage, so a multiplicative mask would not be safe).
    row = jax.lax.broadcasted_iota(jnp.int32, (tn, 1), 0)
    valid = (i * tn + row) < n_rows
    ce_part = jnp.sum(jnp.where(valid, ce_row, 0.0), axis=0, keepdims=True)    # (1, 1)
    rce_part = jnp.sum(jnp.where(valid, rce_row, 0.0), axis=0, keepdims=True)  # (1, 1)

    # Lane-dense (1, 8, 128) output block per grid step (plain unmasked vst).
    ce_ref[...] = jnp.broadcast_to(ce_part.reshape(1, 1, 1), ce_ref.shape)
    rce_ref[...] = jnp.broadcast_to(rce_part.reshape(1, 1, 1), rce_ref.shape)


def _round_up(x, m):
    return ((x + m - 1) // m) * m


def _pick_tile_and_vmem(n, c, pred_dtype):
    """Batch tile TN (byte-targeted) and scoped VMEM limit, per TPU generation.

    Physical VMEM is 128 MiB on v5e/v6e and 64 MiB per TensorCore on v7x; we
    scope half of it.  TN is sized so that (a) each grid step streams ~2 MiB of
    logits (HBM efficiency / per-step overhead amortization), (b) lane-padded
    live f32 temporaries plus double-buffered logit DMA fit the scoped limit,
    and (c) the grid always has >= 2 steps so the "parallel" axis can be split
    across the two v7x TensorCores.
    """
    try:
        info = pltpu.get_tpu_info()
        vmem_cap = int(getattr(info, "vmem_capacity_bytes", 128 * 1024 * 1024))
    except Exception:  # pragma: no cover - non-TPU tracing fallback
        vmem_cap = 128 * 1024 * 1024
    vmem_limit = int(min(max(vmem_cap // 2, 16 * 1024 * 1024), 64 * 1024 * 1024))

    c_pad = _round_up(c, 128)                    # every (TN, c) slab is lane-padded
    pred_row = jnp.dtype(pred_dtype).itemsize * c_pad
    f32_row = 4 * c_pad

    tn_stream = (2 * 1024 * 1024) // pred_row                 # ~2 MiB of logits / step
    tn_vmem = vmem_limit // (2 * pred_row + 10 * f32_row)     # 2x DMA bufs + ~10 live temps
    tn_split = _round_up(pl.cdiv(n, 2), 8)                    # keep >= 2 grid steps

    tn = max(8, min(tn_stream, tn_vmem, tn_split))
    tn = (tn // 8) * 8                                        # sublane alignment
    # TODO(synk): for C < 128 pack 128//C rows per lane-row (wrapper reshape +
    # segmented class reductions) -- the small-C regime is lane-utilization bound.
    # TODO(synk): for vocab-scale C (>=16K) tile the class axis with an online
    # (flash-style) max/sum softmax instead of keeping the class axis resident.
    return tn, vmem_limit


def ce_and_rce(pred, labels, class_weight, alpha, beta):
    """alpha * mean(CE_i) + beta * mean(RCE_i), matching the PyTorch CEandRCE."""
    n, c = pred.shape
    labels2d = labels.astype(jnp.int32).reshape(n, 1)
    w2d = class_weight.astype(jnp.float32).reshape(1, c)

    tn, vmem_limit = _pick_tile_and_vmem(n, c, pred.dtype)
    g = pl.cdiv(n, tn)

    kernel = functools.partial(_ce_rce_kernel, n_rows=n, tn=tn)
    ce_parts, rce_parts = pl.pallas_call(
        kernel,
        out_shape=(
            jax.ShapeDtypeStruct((g, 8, 128), jnp.float32),
            jax.ShapeDtypeStruct((g, 8, 128), jnp.float32),
        ),
        grid_spec=pltpu.PrefetchScalarGridSpec(
            num_scalar_prefetch=0,
            grid=(g,),
            in_specs=[
                pl.BlockSpec((tn, c), lambda i: (i, 0)),   # logits tile (bf16 passthrough)
                pl.BlockSpec((tn, 1), lambda i: (i, 0)),   # labels tile
                pl.BlockSpec((1, c), lambda i: (0, 0)),    # class weights (shared)
            ],
            out_specs=[
                pl.BlockSpec((1, 8, 128), lambda i: (i, 0, 0)),   # per-tile CE partial sum
                pl.BlockSpec((1, 8, 128), lambda i: (i, 0, 0)),   # per-tile RCE partial sum
            ],
        ),
        compiler_params=pltpu.CompilerParams(
            dimension_semantics=("parallel",),             # tiles are independent
            vmem_limit_bytes=vmem_limit,
        ),
    )(pred, labels2d, w2d)

    # Glue: combine the few per-tile partial sums (one scalar each) and scale.
    ce_sum = jnp.sum(ce_parts[:, 0, 0])
    rce_sum = jnp.sum(rce_parts[:, 0, 0])
    return (alpha * ce_sum + beta * rce_sum) / jnp.float32(n)


def _reference(pred, labels, class_weight, alpha, beta):
    """Plain-JAX reference mirroring the PyTorch forward, for sanity check."""
    n, c = pred.shape
    predf = pred.astype(jnp.float32)
    logp = jax.nn.log_softmax(predf, axis=1)
    p = jnp.clip(jax.nn.softmax(predf, axis=1), 1e-7, 1.0)
    onehot = jax.nn.one_hot(labels, c, dtype=jnp.float32)
    oh_cl = jnp.clip(onehot, 1e-4, 1.0)
    w_per = class_weight.astype(jnp.float32)[labels][:, None]
    ce = -jnp.sum(w_per * onehot * logp, axis=1)
    rce = -jnp.sum(w_per * p * jnp.log(oh_cl), axis=1)
    return alpha * ce.mean() + beta * rce.mean()


if __name__ == "__main__":
    key = jax.random.PRNGKey(0)
    alpha, beta = 0.5, 1.0
    fn = jax.jit(functools.partial(ce_and_rce, alpha=alpha, beta=beta))

    k1, k2, k3, k4, k5, k6 = jax.random.split(key, 6)

    # Case 1: small shapes consistent with the module (batch=8, classes=16).
    pred = jax.random.normal(k1, (8, 16), dtype=jnp.float32)
    labels = jax.random.randint(k2, (8,), 0, 16, dtype=jnp.int32)
    class_weight = jax.random.uniform(k3, (16,), dtype=jnp.float32,
                                      minval=0.5, maxval=1.5)
    out = jax.block_until_ready(fn(pred, labels, class_weight))
    ref = _reference(pred, labels, class_weight, alpha, beta)
    # Exact division in-kernel -> typically ~1e-5; tolerance kept modest for CI.
    assert jnp.allclose(out, ref, rtol=1e-3, atol=1e-3), (out, ref)

    # Case 2: multi-tile grid, ragged last tile, bf16 logits (fast path).
    pred2 = jax.random.normal(k4, (2050, 64), dtype=jnp.float32).astype(jnp.bfloat16)
    labels2 = jax.random.randint(k5, (2050,), 0, 64, dtype=jnp.int32)
    class_weight2 = jax.random.uniform(k6, (64,), dtype=jnp.float32,
                                       minval=0.5, maxval=1.5)
    out2 = jax.block_until_ready(fn(pred2, labels2, class_weight2))
    ref2 = _reference(pred2, labels2, class_weight2, alpha, beta)
    assert jnp.allclose(out2, ref2, rtol=1e-3, atol=1e-3), (out2, ref2)

    print("KERNEL_OK")
</pallas_src>

<mosaic_0001>
module attributes {stable_mosaic.version = 11 : i64} {
  func.func @_ce_rce_kernel(%arg0: i32, %arg1: memref<8x16xf32, #tpu.memory_space<vmem>>, %arg2: memref<8x1xi32, #tpu.memory_space<vmem>>, %arg3: memref<1x16xf32, #tpu.memory_space<vmem>>, %arg4: memref<1x8x128xf32, #tpu.memory_space<vmem>>, %arg5: memref<1x8x128xf32, #tpu.memory_space<vmem>>) attributes {dimension_semantics = [#tpu.dimension_semantics<parallel>], iteration_bounds = array<i64: 1>, scalar_prefetch = 0 : i64, scratch_operands = 0 : i64, tpu.core_type = #tpu.core_type<tc>, window_params = [{transform_indices = @transform_0, window_bounds = array<i64: 8, 16>}, {transform_indices = @transform_1, window_bounds = array<i64: 8, 1>}, {pipeline_mode = #tpu.pipeline_mode<synchronous>, transform_indices = @transform_2, window_bounds = array<i64: 1, 16>}, {transform_indices = @transform_3, window_bounds = array<i64: 1, 8, 128>}, {transform_indices = @transform_4, window_bounds = array<i64: 1, 8, 128>}]} {
    %c0 = arith.constant 0 : index
    %c0_0 = arith.constant 0 : index
    %0 = vector.load %arg1[%c0, %c0_0] : memref<8x16xf32, #tpu.memory_space<vmem>>, vector<8x16xf32>
    %c0_1 = arith.constant 0 : index
    %c0_2 = arith.constant 0 : index
    %1 = vector.load %arg2[%c0_1, %c0_2] : memref<8x1xi32, #tpu.memory_space<vmem>>, vector<8x1xi32>
    %c0_3 = arith.constant 0 : index
    %c0_4 = arith.constant 0 : index
    %2 = vector.load %arg3[%c0_3, %c0_4] : memref<1x16xf32, #tpu.memory_space<vmem>>, vector<1x16xf32>
    %cst = arith.constant 1.000000e+00 : f32
    %3 = vector.broadcast %cst : f32 to vector<16x1xf32>
    %cst_5 = arith.constant dense<0xFF800000> : vector<8xf32>
    %4 = vector.multi_reduction <maximumf>, %0, %cst_5 [1] : vector<8x16xf32> to vector<8xf32>
    %5 = vector.shape_cast %4 : vector<8xf32> to vector<8x1xf32>
    %6 = vector.broadcast %5 : vector<8x1xf32> to vector<8x16xf32>
    %7 = arith.subf %0, %6 : vector<8x16xf32>
    %8 = math.exp %7 : vector<8x16xf32>
    %cst_6 = arith.constant dense<0.000000e+00> : vector<8x1xf32>
    %9 = tpu.matmul %8, %3, %cst_6 {dimension_numbers = #tpu.dot_dimension_numbers<[1], [0], [0], [1], [0, 0, 1, 1], [], []>, precision = #tpu.contract_precision<fp32>} : vector<8x16xf32>, vector<16x1xf32>, vector<8x1xf32> -> vector<8x1xf32>
    %cst_7 = arith.constant 1.000000e+00 : f32
    %10 = vector.broadcast %cst_7 : f32 to vector<8x1xf32>
    %11 = arith.divf %10, %9 : vector<8x1xf32>
    %12 = tpu.iota {dimensions = array<i32: 1>} : vector<8x16xi32>
    %13 = vector.broadcast %1 : vector<8x1xi32> to vector<8x16xi32>
    %14 = arith.cmpi eq, %12, %13 : vector<8x16xi32>
    %cst_8 = arith.constant 1.000000e-07 : f32
    %15 = vector.broadcast %cst_8 : f32 to vector<8x1xf32>
    %16 = arith.mulf %15, %9 : vector<8x1xf32>
    %17 = vector.broadcast %16 : vector<8x1xf32> to vector<8x16xf32>
    %18 = arith.maximumf %8, %17 : vector<8x16xf32>
    %cst_9 = arith.constant 0.000000e+00 : f32
    %19 = vector.broadcast %cst_9 : f32 to vector<8x16xf32>
    %20 = arith.select %14, %19, %18 : vector<8x16xi1>, vector<8x16xf32>
    %cst_10 = arith.constant dense<0.000000e+00> : vector<8x1xf32>
    %21 = tpu.matmul %20, %3, %cst_10 {dimension_numbers = #tpu.dot_dimension_numbers<[1], [0], [0], [1], [0, 0, 1, 1], [], []>, precision = #tpu.contract_precision<fp32>} : vector<8x16xf32>, vector<16x1xf32>, vector<8x1xf32> -> vector<8x1xf32>
    %22 = arith.mulf %21, %11 : vector<8x1xf32>
    %cst_11 = arith.constant 0.000000e+00 : f32
    %23 = vector.shape_cast %2 : vector<1x16xf32> to vector<1x16xf32>
    %24 = vector.broadcast %23 : vector<1x16xf32> to vector<8x16xf32>
    %25 = vector.broadcast %cst_11 : f32 to vector<8x16xf32>
    %26 = arith.select %14, %24, %25 : vector<8x16xi1>, vector<8x16xf32>
    %cst_12 = arith.constant dense<0.000000e+00> : vector<8xf32>
    %27 = vector.multi_reduction <add>, %26, %cst_12 [1] : vector<8x16xf32> to vector<8xf32>
    %28 = vector.shape_cast %27 : vector<8xf32> to vector<8x1xf32>
    %cst_13 = arith.constant 0.000000e+00 : f32
    %29 = vector.broadcast %cst_13 : f32 to vector<8x16xf32>
    %30 = arith.select %14, %7, %29 : vector<8x16xi1>, vector<8x16xf32>
    %cst_14 = arith.constant dense<0.000000e+00> : vector<8xf32>
    %31 = vector.multi_reduction <add>, %30, %cst_14 [1] : vector<8x16xf32> to vector<8xf32>
    %32 = vector.shape_cast %31 : vector<8xf32> to vector<8x1xf32>
    %33 = math.log %9 : vector<8x1xf32>
    %34 = arith.subf %32, %33 : vector<8x1xf32>
    %35 = arith.mulf %28, %34 : vector<8x1xf32>
    %cst_15 = arith.constant 0.000000e+00 : f32
    %36 = vector.broadcast %cst_15 : f32 to vector<8x1xf32>
    %37 = arith.subf %36, %35 : vector<8x1xf32>
    %cst_16 = arith.constant 9.21034049 : f32
    %38 = vector.broadcast %cst_16 : f32 to vector<8x1xf32>
    %39 = arith.mulf %38, %28 : vector<8x1xf32>
    %40 = arith.mulf %39, %22 : vector<8x1xf32>
    %41 = tpu.iota {dimensions = array<i32: 0>} : vector<8x1xi32>
    %c8_i32 = arith.constant 8 : i32
    %42 = arith.muli %arg0, %c8_i32 : i32
    %43 = vector.broadcast %42 : i32 to vector<8x1xi32>
    %44 = arith.addi %43, %41 : vector<8x1xi32>
    %c8_i32_17 = arith.constant 8 : i32
    %45 = vector.broadcast %c8_i32_17 : i32 to vector<8x1xi32>
    %46 = arith.cmpi slt, %44, %45 : vector<8x1xi32>
    %cst_18 = arith.constant 0.000000e+00 : f32
    %47 = vector.broadcast %cst_18 : f32 to vector<8x1xf32>
    %48 = arith.select %46, %37, %47 : vector<8x1xi1>, vector<8x1xf32>
    %cst_19 = arith.constant dense<0.000000e+00> : vector<1xf32>
    %49 = vector.multi_reduction <add>, %48, %cst_19 [0] : vector<8x1xf32> to vector<1xf32>
    %50 = vector.shape_cast %49 : vector<1xf32> to vector<1x1xf32>
    %cst_20 = arith.constant 0.000000e+00 : f32
    %51 = vector.broadcast %cst_20 : f32 to vector<8x1xf32>
    %52 = arith.select %46, %40, %51 : vector<8x1xi1>, vector<8x1xf32>
    %cst_21 = arith.constant dense<0.000000e+00> : vector<1xf32>
    %53 = vector.multi_reduction <add>, %52, %cst_21 [0] : vector<8x1xf32> to vector<1xf32>
    %54 = vector.shape_cast %53 : vector<1xf32> to vector<1x1xf32>
    %55 = vector.shape_cast %50 : vector<1x1xf32> to vector<1x1x1xf32>
    %56 = vector.shape_cast %55 : vector<1x1x1xf32> to vector<1x1x1xf32>
    %57 = vector.broadcast %56 : vector<1x1x1xf32> to vector<1x8x128xf32>
    %c0_22 = arith.constant 0 : index
    %c0_23 = arith.constant 0 : index
    %c0_24 = arith.constant 0 : index
    %58 = vector.load %arg4[%c0_22, %c0_23, %c0_24] : memref<1x8x128xf32, #tpu.memory_space<vmem>>, vector<1x8x128xf32>
    tpu.vector_store %arg4[%c0_22, %c0_23, %c0_24], %57 {strides = array<i32>} : memref<1x8x128xf32, #tpu.memory_space<vmem>>, vector<1x8x128xf32>,
    %59 = vector.shape_cast %54 : vector<1x1xf32> to vector<1x1x1xf32>
    %60 = vector.shape_cast %59 : vector<1x1x1xf32> to vector<1x1x1xf32>
    %61 = vector.broadcast %60 : vector<1x1x1xf32> to vector<1x8x128xf32>
    %c0_25 = arith.constant 0 : index
    %c0_26 = arith.constant 0 : index
    %c0_27 = arith.constant 0 : index
    %62 = vector.load %arg5[%c0_25, %c0_26, %c0_27] : memref<1x8x128xf32, #tpu.memory_space<vmem>>, vector<1x8x128xf32>
    tpu.vector_store %arg5[%c0_25, %c0_26, %c0_27], %61 {strides = array<i32>} : memref<1x8x128xf32, #tpu.memory_space<vmem>>, vector<1x8x128xf32>,
    return
  }
  func.func @transform_0(%arg0: i32) -> (i32, i32) {
    %c0_i32 = arith.constant 0 : i32
    %c0_i32_0 = arith.constant 0 : i32
    return %arg0, %c0_i32 : i32, i32
  }
  func.func @transform_1(%arg0: i32) -> (i32, i32) {
    %c0_i32 = arith.constant 0 : i32
    %c0_i32_0 = arith.constant 0 : i32
    return %arg0, %c0_i32 : i32, i32
  }
  func.func @transform_2(%arg0: i32) -> (i32, i32) {
    %c0_i32 = arith.constant 0 : i32
    %c0_i32_0 = arith.constant 0 : i32
    %c0_i32_1 = arith.constant 0 : i32
    return %c0_i32, %c0_i32_0 : i32, i32
  }
  func.func @transform_3(%arg0: i32) -> (i32, i32, i32) {
    %c0_i32 = arith.constant 0 : i32
    %c0_i32_0 = arith.constant 0 : i32
    %c0_i32_1 = arith.constant 0 : i32
    return %arg0, %c0_i32, %c0_i32_0 : i32, i32, i32
  }
  func.func @transform_4(%arg0: i32) -> (i32, i32, i32) {
    %c0_i32 = arith.constant 0 : i32
    %c0_i32_0 = arith.constant 0 : i32
    %c0_i32_1 = arith.constant 0 : i32
    return %arg0, %c0_i32, %c0_i32_0 : i32, i32, i32
  }
}

</mosaic_0001>

<llo_original>
// kernel: ce_and_rce.1
$region0: #{ce_and_rce.1}
  #allocation0 [shape = 'u32[]', space=smem, size = 0x4, offset = 0x4, fixed_abs, tag = 'smem constant byte address 0x4 - core index']
  #allocation1 [shape = 'u32[144,128]{1,0:T(1,128)}', space=vmem, size = 0x12000, scoped, tag = 'internal scratch']
  %s0 = inlined_call_operand.vmem [shape: f32[8,16], index: 0, kind: input, shape index: {}]
  %s1 = inlined_call_operand.vmem [shape: s32[8,1], index: 1, kind: input, shape index: {}]
  %s2 = inlined_call_operand.vmem [shape: f32[1,16], index: 2, kind: input, shape index: {}]
  %s3 = inlined_call_operand.vmem [shape: f32[1,8,128], index: 3, kind: output, shape index: {0}]
  %s4 = inlined_call_operand.vmem [shape: f32[1,8,128], index: 4, kind: output, shape index: {1}]
  %5 = xla_tuple %s3, %s4
  %s6 = sld [smem:[#allocation0]]
  $region30: #{ce_and_rce.1} parent=0
    _
  %s8 = ssub.s32 1, %s6
  %s9 = scalar_select 0, %s8, %s6
  // Predicated region
  $region2: #{ce_and_rce.1} parent=0 // pred_check
    _
  $region3: #{ce_and_rce.1} parent=0 // pred_check_branch
    %11 = sbr.rel (0) target = $region5
  $region4: #{ce_and_rce.1} parent=0 // pred_region
    _
  $region5: #{ce_and_rce.1} parent=0 // pred_fallthru
    _
  // Predicated region
  $region6: #{ce_and_rce.1} parent=0 // pred_check
    _
  $region7: #{ce_and_rce.1} parent=0 // pred_check_branch
    %13 = sbr.rel (0) target = $region9
  $region8: #{ce_and_rce.1} parent=0 // pred_region
    _
  $region9: #{ce_and_rce.1} parent=0 // pred_fallthru
    _
  // Predicated region
  $region10: #{ce_and_rce.1} parent=0 // pred_check
    _
  $region11: #{ce_and_rce.1} parent=0 // pred_check_branch
    %15 = sbr.rel (0) target = $region13
  $region12: #{ce_and_rce.1} parent=0 // pred_region
    _
  $region13: #{ce_and_rce.1} parent=0 // pred_fallthru
    _
  %v16 = vld [vmem:[%s0] sm:$0xff]
  %v17 = vld [vmem:[%s1] sm:$0xff]
  %v18 = vld [vmem:[%s2] sm:$0x1]
  %vm19 = vcmask 130048
  %v20 = vsel %vm19, %v16, -inf
  %21 = vmax.xlane.f32.xlu0 %v20
  %v22 = vpop.xlane.xlu0 %21
  %v23 = vsub.f32 %v16, %v22
  %v24 = vmul.f32 %v23, 1.442695
  %v25 = vpow.pop %v24
  %v27 = vsel %vm19, %v25, 0
  %29 = vmatprep.subr.mxu0 0.0
  %30 = vmatpush1.msra.mxu0 0.0
  %31 = vmatprep.subr.mxu0 0.0
  %32 = vmatpush1.msra.mxu0 0.0
  %33 = vmatprep.subr.mxu0 0.0
  %34 = vmatpush1.msra.mxu0 0.0
  %35 = vmatprep.subr.mxu0 0.0
  %36 = vmatpush1.msra.mxu0 0.0
  %37 = vmatprep.subr.mxu0 0.0
  %38 = vmatpush1.msra.mxu0 0.0
  %39 = vmatprep.subr.mxu0 0.0
  %40 = vmatpush1.msra.mxu0 0.0
  %41 = vmatprep.subr.mxu0 0.0
  %42 = vmatpush1.msra.mxu0 0.0
  %43 = vmatprep.subr.mxu0 0.0
  %44 = vmatpush1.msra.mxu0 0.0
  %45 = vmatprep.subr.mxu0 0.0
  %46 = vmatpush1.msra.mxu0 0.0
  %47 = vmatprep.subr.mxu0 0.0
  %48 = vmatpush1.msra.mxu0 0.0
  %49 = vmatprep.subr.mxu0 0.0
  %50 = vmatpush1.msra.mxu0 0.0
  %51 = vmatprep.subr.mxu0 0.0
  %52 = vmatpush1.msra.mxu0 0.0
  %53 = vmatprep.subr.mxu0 0.0
  %54 = vmatpush1.msra.mxu0 0.0
  %55 = vmatprep.subr.mxu0 0.0
  %56 = vmatpush1.msra.mxu0 0.0
  %57 = vmatprep.subr.mxu0 0.0
  %58 = vmatpush1.msra.mxu0 1.0
  %59 = vmatprep.subr.mxu0 0.0
  %60 = vmatpush1.msra.mxu0 1.0
  %61 = vmatprep.subr.mxu0 0.0
  %62 = vmatpush2.msra.mxu0 0.0
  %63 = vmatprep.subr.mxu0 0.0
  %64 = vmatpush2.msra.mxu0 0.0
  %65 = vmatprep.subr.mxu0 0.0
  %66 = vmatpush2.msra.mxu0 0.0
  %67 = vmatprep.subr.mxu0 0.0
  %68 = vmatpush2.msra.mxu0 0.0
  %69 = vmatprep.subr.mxu0 0.0
  %70 = vmatpush2.msra.mxu0 0.0
  %71 = vmatprep.subr.mxu0 0.0
  %72 = vmatpush2.msra.mxu0 0.0
  %73 = vmatprep.subr.mxu0 0.0
  %74 = vmatpush2.msra.mxu0 0.0
  %75 = vmatprep.subr.mxu0 0.0
  %76 = vmatpush2.msra.mxu0 0.0
  %77 = vmatprep.subr.mxu0 0.0
  %78 = vmatpush2.msra.mxu0 0.0
  %79 = vmatprep.subr.mxu0 0.0
  %80 = vmatpush2.msra.mxu0 0.0
  %81 = vmatprep.subr.mxu0 0.0
  %82 = vmatpush2.msra.mxu0 0.0
  %83 = vmatprep.subr.mxu0 0.0
  %84 = vmatpush2.msra.mxu0 0.0
  %85 = vmatprep.subr.mxu0 0.0
  %86 = vmatpush2.msra.mxu0 0.0
  %87 = vmatprep.subr.mxu0 0.0
  %88 = vmatpush2.msra.mxu0 0.0
  %89 = vmatprep.subr.mxu0 0.0
  %90 = vmatpush2.msra.mxu0 0.0
  %91 = vmatprep.subr.mxu0 0.0
  %92 = vmatpush2.msra.mxu0 0.0
  %93 = vmatprep.mubr.f32.mxu0 0.0
  %v94 = vand.u32 %v27, 4294901760
  %v95 = vsub.f32 %v27, %v94
  %v96 = vand.u32 %v95, 4294901760
  %v97 = vsub.f32 %v95, %v96
  %v98 = vand.u32 %v97, 4294901760
  %99 = vmatmul.mubr.f32.gmra.mxu0 %v98
  %v100 = vpop.f32.mrf.mxu0
  %v101 = vadd.f32 0.0, %v100
  %v102 = vpop.f32.mrf.mxu0
  %103 = vdwg.mxu0
  %104 = vmatprep.subr.mxu0 0.0
  %105 = vmatpush1.msra.mxu0 0.0
  %106 = vmatprep.subr.mxu0 0.0
  %107 = vmatpush1.msra.mxu0 0.0
  %108 = vmatprep.subr.mxu0 0.0
  %109 = vmatpush1.msra.mxu0 0.0
  %110 = vmatprep.subr.mxu0 0.0
  %111 = vmatpush1.msra.mxu0 0.0
  %112 = vmatprep.subr.mxu0 0.0
  %113 = vmatpush1.msra.mxu0 0.0
  %114 = vmatprep.subr.mxu0 0.0
  %115 = vmatpush1.msra.mxu0 0.0
  %116 = vmatprep.subr.mxu0 0.0
  %117 = vmatpush1.msra.mxu0 0.0
  %118 = vmatprep.subr.mxu0 0.0
  %119 = vmatpush1.msra.mxu0 0.0
  %120 = vmatprep.subr.mxu0 0.0
  %121 = vmatpush1.msra.mxu0 0.0
  %122 = vmatprep.subr.mxu0 0.0
  %123 = vmatpush1.msra.mxu0 0.0
  %124 = vmatprep.subr.mxu0 0.0
  %125 = vmatpush1.msra.mxu0 0.0
  %126 = vmatprep.subr.mxu0 0.0
  %127 = vmatpush1.msra.mxu0 0.0
  %128 = vmatprep.subr.mxu0 0.0
  %129 = vmatpush1.msra.mxu0 0.0
  %130 = vmatprep.subr.mxu0 0.0
  %131 = vmatpush1.msra.mxu0 0.0
  %132 = vmatprep.subr.mxu0 0.0
  %133 = vmatpush1.msra.mxu0 0.0
  %134 = vmatprep.subr.mxu0 0.0
  %135 = vmatpush1.msra.mxu0 0.0
  %136 = vmatprep.subr.mxu0 0.0
  %137 = vmatpush2.msra.mxu0 0.0
  %138 = vmatprep.subr.mxu0 0.0
  %139 = vmatpush2.msra.mxu0 0.0
  %140 = vmatprep.subr.mxu0 0.0
  %141 = vmatpush2.msra.mxu0 0.0
  %142 = vmatprep.subr.mxu0 0.0
  %143 = vmatpush2.msra.mxu0 0.0
  %144 = vmatprep.subr.mxu0 0.0
  %145 = vmatpush2.msra.mxu0 0.0
  %146 = vmatprep.subr.mxu0 0.0
  %147 = vmatpush2.msra.mxu0 0.0
  %148 = vmatprep.subr.mxu0 0.0
  %149 = vmatpush2.msra.mxu0 0.0
  %150 = vmatprep.subr.mxu0 0.0
  %151 = vmatpush2.msra.mxu0 0.0
  %152 = vmatprep.subr.mxu0 0.0
  %153 = vmatpush2.msra.mxu0 0.0
  %154 = vmatprep.subr.mxu0 0.0
  %155 = vmatpush2.msra.mxu0 0.0
  %156 = vmatprep.subr.mxu0 0.0
  %157 = vmatpush2.msra.mxu0 0.0
  %158 = vmatprep.subr.mxu0 0.0
  %159 = vmatpush2.msra.mxu0 0.0
  %160 = vmatprep.subr.mxu0 0.0
  %161 = vmatpush2.msra.mxu0 0.0
  %162 = vmatprep.subr.mxu0 0.0
  %163 = vmatpush2.msra.mxu0 0.0
  %164 = vmatprep.subr.mxu0 0.0
  %165 = vmatpush2.msra.mxu0 0.0
  %166 = vmatprep.subr.mxu0 0.0
  %167 = vmatpush2.msra.mxu0 0.0
  %168 = vmatprep.mubr.f32.mxu0 0.0
  %v169 = vand.u32 %v27, 4294901760
  %170 = vmatmul.mubr.f32.gmra.mxu0 %v169
  %v171 = vpop.f32.mrf.mxu0
  %v172 = vadd.f32 %v101, %v171
  %v173 = vpop.f32.mrf.mxu0
  %174 = vdwg.mxu0
  %175 = vmatprep.subr.mxu0 0.0
  %176 = vmatpush1.msra.mxu0 0.0
  %177 = vmatprep.subr.mxu0 0.0
  %178 = vmatpush1.msra.mxu0 0.0
  %179 = vmatprep.subr.mxu0 0.0
  %180 = vmatpush1.msra.mxu0 0.0
  %181 = vmatprep.subr.mxu0 0.0
  %182 = vmatpush1.msra.mxu0 0.0
  %183 = vmatprep.subr.mxu0 0.0
  %184 = vmatpush1.msra.mxu0 0.0
  %185 = vmatprep.subr.mxu0 0.0
  %186 = vmatpush1.msra.mxu0 0.0
  %187 = vmatprep.subr.mxu0 0.0
  %188 = vmatpush1.msra.mxu0 0.0
  %189 = vmatprep.subr.mxu0 0.0
  %190 = vmatpush1.msra.mxu0 0.0
  %191 = vmatprep.subr.mxu0 0.0
  %192 = vmatpush1.msra.mxu0 0.0
  %193 = vmatprep.subr.mxu0 0.0
  %194 = vmatpush1.msra.mxu0 0.0
  %195 = vmatprep.subr.mxu0 0.0
  %196 = vmatpush1.msra.mxu0 0.0
  %197 = vmatprep.subr.mxu0 0.0
  %198 = vmatpush1.msra.mxu0 0.0
  %199 = vmatprep.subr.mxu0 0.0
  %200 = vmatpush1.msra.mxu0 0.0
  %201 = vmatprep.subr.mxu0 0.0
  %202 = vmatpush1.msra.mxu0 0.0
  %203 = vmatprep.subr.mxu0 0.0
  %204 = vmatpush1.msra.mxu0 0.0
  %205 = vmatprep.subr.mxu0 0.0
  %206 = vmatpush1.msra.mxu0 0.0
  %207 = vmatprep.subr.mxu0 0.0
  %208 = vmatpush2.msra.mxu0 0.0
  %209 = vmatprep.subr.mxu0 0.0
  %210 = vmatpush2.msra.mxu0 0.0
  %211 = vmatprep.subr.mxu0 0.0
  %212 = vmatpush2.msra.mxu0 0.0
  %213 = vmatprep.subr.mxu0 0.0
  %214 = vmatpush2.msra.mxu0 0.0
  %215 = vmatprep.subr.mxu0 0.0
  %216 = vmatpush2.msra.mxu0 0.0
  %217 = vmatprep.subr.mxu0 0.0
  %218 = vmatpush2.msra.mxu0 0.0
  %219 = vmatprep.subr.mxu0 0.0
  %220 = vmatpush2.msra.mxu0 0.0
  %221 = vmatprep.subr.mxu0 0.0
  %222 = vmatpush2.msra.mxu0 0.0
  %223 = vmatprep.subr.mxu0 0.0
  %224 = vmatpush2.msra.mxu0 0.0
  %225 = vmatprep.subr.mxu0 0.0
  %226 = vmatpush2.msra.mxu0 0.0
  %227 = vmatprep.subr.mxu0 0.0
  %228 = vmatpush2.msra.mxu0 0.0
  %229 = vmatprep.subr.mxu0 0.0
  %230 = vmatpush2.msra.mxu0 0.0
  %231 = vmatprep.subr.mxu0 0.0
  %232 = vmatpush2.msra.mxu0 0.0
  %233 = vmatprep.subr.mxu0 0.0
  %234 = vmatpush2.msra.mxu0 0.0
  %235 = vmatprep.subr.mxu0 0.0
  %236 = vmatpush2.msra.mxu0 0.0
  %237 = vmatprep.subr.mxu0 0.0
  %238 = vmatpush2.msra.mxu0 0.0
  %239 = vmatprep.mubr.f32.mxu0 0.0
  %v240 = vand.u32 %v27, 4294901760
  %v241 = vsub.f32 %v27, %v240
  %242 = vmatmul.mubr.f32.gmra.mxu0 %v241
  %v243 = vpop.f32.mrf.mxu0
  %v244 = vadd.f32 %v172, %v243
  %v245 = vpop.f32.mrf.mxu0
  %246 = vdwg.mxu0
  %247 = vmatprep.subr.mxu0 0.0
  %248 = vmatpush1.msra.mxu0 0.0
  %249 = vmatprep.subr.mxu0 0.0
  %250 = vmatpush1.msra.mxu0 0.0
  %251 = vmatprep.subr.mxu0 0.0
  %252 = vmatpush1.msra.mxu0 0.0
  %253 = vmatprep.subr.mxu0 0.0
  %254 = vmatpush1.msra.mxu0 0.0
  %255 = vmatprep.subr.mxu0 0.0
  %256 = vmatpush1.msra.mxu0 0.0
  %257 = vmatprep.subr.mxu0 0.0
  %258 = vmatpush1.msra.mxu0 0.0
  %259 = vmatprep.subr.mxu0 0.0
  %260 = vmatpush1.msra.mxu0 0.0
  %261 = vmatprep.subr.mxu0 0.0
  %262 = vmatpush1.msra.mxu0 0.0
  %263 = vmatprep.subr.mxu0 0.0
  %264 = vmatpush1.msra.mxu0 0.0
  %265 = vmatprep.subr.mxu0 0.0
  %266 = vmatpush1.msra.mxu0 0.0
  %267 = vmatprep.subr.mxu0 0.0
  %268 = vmatpush1.msra.mxu0 0.0
  %269 = vmatprep.subr.mxu0 0.0
  %270 = vmatpush1.msra.mxu0 0.0
  %271 = vmatprep.subr.mxu0 0.0
  %272 = vmatpush1.msra.mxu0 0.0
  %273 = vmatprep.subr.mxu0 0.0
  %274 = vmatpush1.msra.mxu0 0.0
  %275 = vmatprep.subr.mxu0 0.0
  %276 = vmatpush1.msra.mxu0 1.0
  %277 = vmatprep.subr.mxu0 0.0
  %278 = vmatpush1.msra.mxu0 1.0
  %279 = vmatprep.subr.mxu0 0.0
  %280 = vmatpush2.msra.mxu0 0.0
  %281 = vmatprep.subr.mxu0 0.0
  %282 = vmatpush2.msra.mxu0 0.0
  %283 = vmatprep.subr.mxu0 0.0
  %284 = vmatpush2.msra.mxu0 0.0
  %285 = vmatprep.subr.mxu0 0.0
  %286 = vmatpush2.msra.mxu0 0.0
  %287 = vmatprep.subr.mxu0 0.0
  %288 = vmatpush2.msra.mxu0 0.0
  %289 = vmatprep.subr.mxu0 0.0
  %290 = vmatpush2.msra.mxu0 0.0
  %291 = vmatprep.subr.mxu0 0.0
  %292 = vmatpush2.msra.mxu0 0.0
  %293 = vmatprep.subr.mxu0 0.0
  %294 = vmatpush2.msra.mxu0 0.0
  %295 = vmatprep.subr.mxu0 0.0
  %296 = vmatpush2.msra.mxu0 0.0
  %297 = vmatprep.subr.mxu0 0.0
  %298 = vmatpush2.msra.mxu0 0.0
  %299 = vmatprep.subr.mxu0 0.0
  %300 = vmatpush2.msra.mxu0 0.0
  %301 = vmatprep.subr.mxu0 0.0
  %302 = vmatpush2.msra.mxu0 0.0
  %303 = vmatprep.subr.mxu0 0.0
  %304 = vmatpush2.msra.mxu0 0.0
  %305 = vmatprep.subr.mxu0 0.0
  %306 = vmatpush2.msra.mxu0 0.0
  %307 = vmatprep.subr.mxu0 0.0
  %308 = vmatpush2.msra.mxu0 0.0
  %309 = vmatprep.subr.mxu0 0.0
  %310 = vmatpush2.msra.mxu0 0.0
  %311 = vmatprep.mubr.f32.mxu0 0.0
  %v312 = vand.u32 %v27, 4294901760
  %v313 = vsub.f32 %v27, %v312
  %v314 = vand.u32 %v313, 4294901760
  %315 = vmatmul.mubr.f32.gmra.mxu0 %v314
  %v316 = vpop.f32.mrf.mxu0
  %v317 = vadd.f32 %v244, %v316
  %v318 = vpop.f32.mrf.mxu0
  %319 = vdwg.mxu0
  %320 = vmatprep.subr.mxu0 0.0
  %321 = vmatpush1.msra.mxu0 0.0
  %322 = vmatprep.subr.mxu0 0.0
  %323 = vmatpush1.msra.mxu0 0.0
  %324 = vmatprep.subr.mxu0 0.0
  %325 = vmatpush1.msra.mxu0 0.0
  %326 = vmatprep.subr.mxu0 0.0
  %327 = vmatpush1.msra.mxu0 0.0
  %328 = vmatprep.subr.mxu0 0.0
  %329 = vmatpush1.msra.mxu0 0.0
  %330 = vmatprep.subr.mxu0 0.0
  %331 = vmatpush1.msra.mxu0 0.0
  %332 = vmatprep.subr.mxu0 0.0
  %333 = vmatpush1.msra.mxu0 0.0
  %334 = vmatprep.subr.mxu0 0.0
  %335 = vmatpush1.msra.mxu0 0.0
  %336 = vmatprep.subr.mxu0 0.0
  %337 = vmatpush1.msra.mxu0 0.0
  %338 = vmatprep.subr.mxu0 0.0
  %339 = vmatpush1.msra.mxu0 0.0
  %340 = vmatprep.subr.mxu0 0.0
  %341 = vmatpush1.msra.mxu0 0.0
  %342 = vmatprep.subr.mxu0 0.0
  %343 = vmatpush1.msra.mxu0 0.0
  %344 = vmatprep.subr.mxu0 0.0
  %345 = vmatpush1.msra.mxu0 0.0
  %346 = vmatprep.subr.mxu0 0.0
  %347 = vmatpush1.msra.mxu0 0.0
  %348 = vmatprep.subr.mxu0 0.0
  %349 = vmatpush1.msra.mxu0 0.0
  %350 = vmatprep.subr.mxu0 0.0
  %351 = vmatpush1.msra.mxu0 0.0
  %352 = vmatprep.subr.mxu0 0.0
  %353 = vmatpush2.msra.mxu0 0.0
  %354 = vmatprep.subr.mxu0 0.0
  %355 = vmatpush2.msra.mxu0 0.0
  %356 = vmatprep.subr.mxu0 0.0
  %357 = vmatpush2.msra.mxu0 0.0
  %358 = vmatprep.subr.mxu0 0.0
  %359 = vmatpush2.msra.mxu0 0.0
  %360 = vmatprep.subr.mxu0 0.0
  %361 = vmatpush2.msra.mxu0 0.0
  %362 = vmatprep.subr.mxu0 0.0
  %363 = vmatpush2.msra.mxu0 0.0
  %364 = vmatprep.subr.mxu0 0.0
  %365 = vmatpush2.msra.mxu0 0.0
  %366 = vmatprep.subr.mxu0 0.0
  %367 = vmatpush2.msra.mxu0 0.0
  %368 = vmatprep.subr.mxu0 0.0
  %369 = vmatpush2.msra.mxu0 0.0
  %370 = vmatprep.subr.mxu0 0.0
  %371 = vmatpush2.msra.mxu0 0.0
  %372 = vmatprep.subr.mxu0 0.0
  %373 = vmatpush2.msra.mxu0 0.0
  %374 = vmatprep.subr.mxu0 0.0
  %375 = vmatpush2.msra.mxu0 0.0
  %376 = vmatprep.subr.mxu0 0.0
  %377 = vmatpush2.msra.mxu0 0.0
  %378 = vmatprep.subr.mxu0 0.0
  %379 = vmatpush2.msra.mxu0 0.0
  %380 = vmatprep.subr.mxu0 0.0
  %381 = vmatpush2.msra.mxu0 0.0
  %382 = vmatprep.subr.mxu0 0.0
  %383 = vmatpush2.msra.mxu0 0.0
  %384 = vmatprep.mubr.f32.mxu0 0.0
  %v385 = vand.u32 %v27, 4294901760
  %386 = vmatmul.mubr.f32.gmra.mxu0 %v385
  %v387 = vpop.f32.mrf.mxu0
  %v388 = vadd.f32 %v317, %v387
  %v389 = vpop.f32.mrf.mxu0
  %390 = vdwg.mxu0
  %391 = vmatprep.subr.mxu0 0.0
  %392 = vmatpush1.msra.mxu0 0.0
  %393 = vmatprep.subr.mxu0 0.0
  %394 = vmatpush1.msra.mxu0 0.0
  %395 = vmatprep.subr.mxu0 0.0
  %396 = vmatpush1.msra.mxu0 0.0
  %397 = vmatprep.subr.mxu0 0.0
  %398 = vmatpush1.msra.mxu0 0.0
  %399 = vmatprep.subr.mxu0 0.0
  %400 = vmatpush1.msra.mxu0 0.0
  %401 = vmatprep.subr.mxu0 0.0
  %402 = vmatpush1.msra.mxu0 0.0
  %403 = vmatprep.subr.mxu0 0.0
  %404 = vmatpush1.msra.mxu0 0.0
  %405 = vmatprep.subr.mxu0 0.0
  %406 = vmatpush1.msra.mxu0 0.0
  %407 = vmatprep.subr.mxu0 0.0
  %408 = vmatpush1.msra.mxu0 0.0
  %409 = vmatprep.subr.mxu0 0.0
  %410 = vmatpush1.msra.mxu0 0.0
  %411 = vmatprep.subr.mxu0 0.0
  %412 = vmatpush1.msra.mxu0 0.0
  %413 = vmatprep.subr.mxu0 0.0
  %414 = vmatpush1.msra.mxu0 0.0
  %415 = vmatprep.subr.mxu0 0.0
  %416 = vmatpush1.msra.mxu0 0.0
  %417 = vmatprep.subr.mxu0 0.0
  %418 = vmatpush1.msra.mxu0 0.0
  %419 = vmatprep.subr.mxu0 0.0
  %420 = vmatpush1.msra.mxu0 1.0
  %421 = vmatprep.subr.mxu0 0.0
  %422 = vmatpush1.msra.mxu0 1.0
  %423 = vmatprep.subr.mxu0 0.0
  %424 = vmatpush2.msra.mxu0 0.0
  %425 = vmatprep.subr.mxu0 0.0
  %426 = vmatpush2.msra.mxu0 0.0
  %427 = vmatprep.subr.mxu0 0.0
  %428 = vmatpush2.msra.mxu0 0.0
  %429 = vmatprep.subr.mxu0 0.0
  %430 = vmatpush2.msra.mxu0 0.0
  %431 = vmatprep.subr.mxu0 0.0
  %432 = vmatpush2.msra.mxu0 0.0
  %433 = vmatprep.subr.mxu0 0.0
  %434 = vmatpush2.msra.mxu0 0.0
  %435 = vmatprep.subr.mxu0 0.0
  %436 = vmatpush2.msra.mxu0 0.0
  %437 = vmatprep.subr.mxu0 0.0
  %438 = vmatpush2.msra.mxu0 0.0
  %439 = vmatprep.subr.mxu0 0.0
  %440 = vmatpush2.msra.mxu0 0.0
  %441 = vmatprep.subr.mxu0 0.0
  %442 = vmatpush2.msra.mxu0 0.0
  %443 = vmatprep.subr.mxu0 0.0
  %444 = vmatpush2.msra.mxu0 0.0
  %445 = vmatprep.subr.mxu0 0.0
  %446 = vmatpush2.msra.mxu0 0.0
  %447 = vmatprep.subr.mxu0 0.0
  %448 = vmatpush2.msra.mxu0 0.0
  %449 = vmatprep.subr.mxu0 0.0
  %450 = vmatpush2.msra.mxu0 0.0
  %451 = vmatprep.subr.mxu0 0.0
  %452 = vmatpush2.msra.mxu0 0.0
  %453 = vmatprep.subr.mxu0 0.0
  %454 = vmatpush2.msra.mxu0 0.0
  %455 = vmatprep.mubr.f32.mxu0 0.0
  %v456 = vand.u32 %v27, 4294901760
  %457 = vmatmul.mubr.f32.gmra.mxu0 %v456
  %v458 = vpop.f32.mrf.mxu0
  %v459 = vadd.f32 %v388, %v458
  %v460 = vpop.f32.mrf.mxu0
  %461 = vdwg.mxu0
  %v462 = vrcp.pop %v459
  %v463 = vmul.f32 1.0, %v462
  %v464 = vlaneseq
  %v465 = vand.u32 %v464, 127
  %466 = vset.pattern.permute.xlu0 0
  %467 = vperm.xlu0 %466, %v17
  %v468 = vpop.permute.xlu0 %467
  %vm469 = vcmp.eq.s32.totalorder %v465, %v468
  %v470 = vmul.f32 %v459, 1e-07
  %472 = vset.pattern.permute.xlu0 0
  %473 = vperm.xlu0 %472, %v470
  %v474 = vpop.permute.xlu0 %473
  %v476 = vmax.f32 %v25, %v474
  %v477 = vsel %vm469, 0.0, %v476
  %v479 = vsel %vm19, %v477, 0
  %481 = vmatprep.subr.mxu0 0.0
  %482 = vmatpush1.msra.mxu0 0.0
  %483 = vmatprep.subr.mxu0 0.0
  %484 = vmatpush1.msra.mxu0 0.0
  %485 = vmatprep.subr.mxu0 0.0
  %486 = vmatpush1.msra.mxu0 0.0
  %487 = vmatprep.subr.mxu0 0.0
  %488 = vmatpush1.msra.mxu0 0.0
  %489 = vmatprep.subr.mxu0 0.0
  %490 = vmatpush1.msra.mxu0 0.0
  %491 = vmatprep.subr.mxu0 0.0
  %492 = vmatpush1.msra.mxu0 0.0
  %493 = vmatprep.subr.mxu0 0.0
  %494 = vmatpush1.msra.mxu0 0.0
  %495 = vmatprep.subr.mxu0 0.0
  %496 = vmatpush1.msra.mxu0 0.0
  %497 = vmatprep.subr.mxu0 0.0
  %498 = vmatpush1.msra.mxu0 0.0
  %499 = vmatprep.subr.mxu0 0.0
  %500 = vmatpush1.msra.mxu0 0.0
  %501 = vmatprep.subr.mxu0 0.0
  %502 = vmatpush1.msra.mxu0 0.0
  %503 = vmatprep.subr.mxu0 0.0
  %504 = vmatpush1.msra.mxu0 0.0
  %505 = vmatprep.subr.mxu0 0.0
  %506 = vmatpush1.msra.mxu0 0.0
  %507 = vmatprep.subr.mxu0 0.0
  %508 = vmatpush1.msra.mxu0 0.0
  %509 = vmatprep.subr.mxu0 0.0
  %510 = vmatpush1.msra.mxu0 1.0
  %511 = vmatprep.subr.mxu0 0.0
  %512 = vmatpush1.msra.mxu0 1.0
  %513 = vmatprep.subr.mxu0 0.0
  %514 = vmatpush2.msra.mxu0 0.0
  %515 = vmatprep.subr.mxu0 0.0
  %516 = vmatpush2.msra.mxu0 0.0
  %517 = vmatprep.subr.mxu0 0.0
  %518 = vmatpush2.msra.mxu0 0.0
  %519 = vmatprep.subr.mxu0 0.0
  %520 = vmatpush2.msra.mxu0 0.0
  %521 = vmatprep.subr.mxu0 0.0
  %522 = vmatpush2.msra.mxu0 0.0
  %523 = vmatprep.subr.mxu0 0.0
  %524 = vmatpush2.msra.mxu0 0.0
  %525 = vmatprep.subr.mxu0 0.0
  %526 = vmatpush2.msra.mxu0 0.0
  %527 = vmatprep.subr.mxu0 0.0
  %528 = vmatpush2.msra.mxu0 0.0
  %529 = vmatprep.subr.mxu0 0.0
  %530 = vmatpush2.msra.mxu0 0.0
  %531 = vmatprep.subr.mxu0 0.0
  %532 = vmatpush2.msra.mxu0 0.0
  %533 = vmatprep.subr.mxu0 0.0
  %534 = vmatpush2.msra.mxu0 0.0
  %535 = vmatprep.subr.mxu0 0.0
  %536 = vmatpush2.msra.mxu0 0.0
  %537 = vmatprep.subr.mxu0 0.0
  %538 = vmatpush2.msra.mxu0 0.0
  %539 = vmatprep.subr.mxu0 0.0
  %540 = vmatpush2.msra.mxu0 0.0
  %541 = vmatprep.subr.mxu0 0.0
  %542 = vmatpush2.msra.mxu0 0.0
  %543 = vmatprep.subr.mxu0 0.0
  %544 = vmatpush2.msra.mxu0 0.0
  %545 = vmatprep.mubr.f32.mxu0 0.0
  %v546 = vand.u32 %v479, 4294901760
  %v547 = vsub.f32 %v479, %v546
  %v548 = vand.u32 %v547, 4294901760
  %v549 = vsub.f32 %v547, %v548
  %v550 = vand.u32 %v549, 4294901760
  %551 = vmatmul.mubr.f32.gmra.mxu0 %v550
  %v552 = vpop.f32.mrf.mxu0
  %v553 = vadd.f32 0.0, %v552
  %v554 = vpop.f32.mrf.mxu0
  %555 = vdwg.mxu0
  %556 = vmatprep.subr.mxu0 0.0
  %557 = vmatpush1.msra.mxu0 0.0
  %558 = vmatprep.subr.mxu0 0.0
  %559 = vmatpush1.msra.mxu0 0.0
  %560 = vmatprep.subr.mxu0 0.0
  %561 = vmatpush1.msra.mxu0 0.0
  %562 = vmatprep.subr.mxu0 0.0
  %563 = vmatpush1.msra.mxu0 0.0
  %564 = vmatprep.subr.mxu0 0.0
  %565 = vmatpush1.msra.mxu0 0.0
  %566 = vmatprep.subr.mxu0 0.0
  %567 = vmatpush1.msra.mxu0 0.0
  %568 = vmatprep.subr.mxu0 0.0
  %569 = vmatpush1.msra.mxu0 0.0
  %570 = vmatprep.subr.mxu0 0.0
  %571 = vmatpush1.msra.mxu0 0.0
  %572 = vmatprep.subr.mxu0 0.0
  %573 = vmatpush1.msra.mxu0 0.0
  %574 = vmatprep.subr.mxu0 0.0
  %575 = vmatpush1.msra.mxu0 0.0
  %576 = vmatprep.subr.mxu0 0.0
  %577 = vmatpush1.msra.mxu0 0.0
  %578 = vmatprep.subr.mxu0 0.0
  %579 = vmatpush1.msra.mxu0 0.0
  %580 = vmatprep.subr.mxu0 0.0
  %581 = vmatpush1.msra.mxu0 0.0
  %582 = vmatprep.subr.mxu0 0.0
  %583 = vmatpush1.msra.mxu0 0.0
  %584 = vmatprep.subr.mxu0 0.0
  %585 = vmatpush1.msra.mxu0 0.0
  %586 = vmatprep.subr.mxu0 0.0
  %587 = vmatpush1.msra.mxu0 0.0
  %588 = vmatprep.subr.mxu0 0.0
  %589 = vmatpush2.msra.mxu0 0.0
  %590 = vmatprep.subr.mxu0 0.0
  %591 = vmatpush2.msra.mxu0 0.0
  %592 = vmatprep.subr.mxu0 0.0
  %593 = vmatpush2.msra.mxu0 0.0
  %594 = vmatprep.subr.mxu0 0.0
  %595 = vmatpush2.msra.mxu0 0.0
  %596 = vmatprep.subr.mxu0 0.0
  %597 = vmatpush2.msra.mxu0 0.0
  %598 = vmatprep.subr.mxu0 0.0
  %599 = vmatpush2.msra.mxu0 0.0
  %600 = vmatprep.subr.mxu0 0.0
  %601 = vmatpush2.msra.mxu0 0.0
  %602 = vmatprep.subr.mxu0 0.0
  %603 = vmatpush2.msra.mxu0 0.0
  %604 = vmatprep.subr.mxu0 0.0
  %605 = vmatpush2.msra.mxu0 0.0
  %606 = vmatprep.subr.mxu0 0.0
  %607 = vmatpush2.msra.mxu0 0.0
  %608 = vmatprep.subr.mxu0 0.0
  %609 = vmatpush2.msra.mxu0 0.0
  %610 = vmatprep.subr.mxu0 0.0
  %611 = vmatpush2.msra.mxu0 0.0
  %612 = vmatprep.subr.mxu0 0.0
  %613 = vmatpush2.msra.mxu0 0.0
  %614 = vmatprep.subr.mxu0 0.0
  %615 = vmatpush2.msra.mxu0 0.0
  %616 = vmatprep.subr.mxu0 0.0
  %617 = vmatpush2.msra.mxu0 0.0
  %618 = vmatprep.subr.mxu0 0.0
  %619 = vmatpush2.msra.mxu0 0.0
  %620 = vmatprep.mubr.f32.mxu0 0.0
  %v621 = vand.u32 %v479, 4294901760
  %622 = vmatmul.mubr.f32.gmra.mxu0 %v621
  %v623 = vpop.f32.mrf.mxu0
  %v624 = vadd.f32 %v553, %v623
  %v625 = vpop.f32.mrf.mxu0
  %626 = vdwg.mxu0
  %627 = vmatprep.subr.mxu0 0.0
  %628 = vmatpush1.msra.mxu0 0.0
  %629 = vmatprep.subr.mxu0 0.0
  %630 = vmatpush1.msra.mxu0 0.0
  %631 = vmatprep.subr.mxu0 0.0
  %632 = vmatpush1.msra.mxu0 0.0
  %633 = vmatprep.subr.mxu0 0.0
  %634 = vmatpush1.msra.mxu0 0.0
  %635 = vmatprep.subr.mxu0 0.0
  %636 = vmatpush1.msra.mxu0 0.0
  %637 = vmatprep.subr.mxu0 0.0
  %638 = vmatpush1.msra.mxu0 0.0
  %639 = vmatprep.subr.mxu0 0.0
  %640 = vmatpush1.msra.mxu0 0.0
  %641 = vmatprep.subr.mxu0 0.0
  %642 = vmatpush1.msra.mxu0 0.0
  %643 = vmatprep.subr.mxu0 0.0
  %644 = vmatpush1.msra.mxu0 0.0
  %645 = vmatprep.subr.mxu0 0.0
  %646 = vmatpush1.msra.mxu0 0.0
  %647 = vmatprep.subr.mxu0 0.0
  %648 = vmatpush1.msra.mxu0 0.0
  %649 = vmatprep.subr.mxu0 0.0
  %650 = vmatpush1.msra.mxu0 0.0
  %651 = vmatprep.subr.mxu0 0.0
  %652 = vmatpush1.msra.mxu0 0.0
  %653 = vmatprep.subr.mxu0 0.0
  %654 = vmatpush1.msra.mxu0 0.0
  %655 = vmatprep.subr.mxu0 0.0
  %656 = vmatpush1.msra.mxu0 0.0
  %657 = vmatprep.subr.mxu0 0.0
  %658 = vmatpush1.msra.mxu0 0.0
  %659 = vmatprep.subr.mxu0 0.0
  %660 = vmatpush2.msra.mxu0 0.0
  %661 = vmatprep.subr.mxu0 0.0
  %662 = vmatpush2.msra.mxu0 0.0
  %663 = vmatprep.subr.mxu0 0.0
  %664 = vmatpush2.msra.mxu0 0.0
  %665 = vmatprep.subr.mxu0 0.0
  %666 = vmatpush2.msra.mxu0 0.0
  %667 = vmatprep.subr.mxu0 0.0
  %668 = vmatpush2.msra.mxu0 0.0
  %669 = vmatprep.subr.mxu0 0.0
  %670 = vmatpush2.msra.mxu0 0.0
  %671 = vmatprep.subr.mxu0 0.0
  %672 = vmatpush2.msra.mxu0 0.0
  %673 = vmatprep.subr.mxu0 0.0
  %674 = vmatpush2.msra.mxu0 0.0
  %675 = vmatprep.subr.mxu0 0.0
  %676 = vmatpush2.msra.mxu0 0.0
  %677 = vmatprep.subr.mxu0 0.0
  %678 = vmatpush2.msra.mxu0 0.0
  %679 = vmatprep.subr.mxu0 0.0
  %680 = vmatpush2.msra.mxu0 0.0
  %681 = vmatprep.subr.mxu0 0.0
  %682 = vmatpush2.msra.mxu0 0.0
  %683 = vmatprep.subr.mxu0 0.0
  %684 = vmatpush2.msra.mxu0 0.0
  %685 = vmatprep.subr.mxu0 0.0
  %686 = vmatpush2.msra.mxu0 0.0
  %687 = vmatprep.subr.mxu0 0.0
  %688 = vmatpush2.msra.mxu0 0.0
  %689 = vmatprep.subr.mxu0 0.0
  %690 = vmatpush2.msra.mxu0 0.0
  %691 = vmatprep.mubr.f32.mxu0 0.0
  %v692 = vand.u32 %v479, 4294901760
  %v693 = vsub.f32 %v479, %v692
  %694 = vmatmul.mubr.f32.gmra.mxu0 %v693
  %v695 = vpop.f32.mrf.mxu0
  %v696 = vadd.f32 %v624, %v695
  %v697 = vpop.f32.mrf.mxu0
  %698 = vdwg.mxu0
  %699 = vmatprep.subr.mxu0 0.0
  %700 = vmatpush1.msra.mxu0 0.0
  %701 = vmatprep.subr.mxu0 0.0
  %702 = vmatpush1.msra.mxu0 0.0
  %703 = vmatprep.subr.mxu0 0.0
  %704 = vmatpush1.msra.mxu0 0.0
  %705 = vmatprep.subr.mxu0 0.0
  %706 = vmatpush1.msra.mxu0 0.0
  %707 = vmatprep.subr.mxu0 0.0
  %708 = vmatpush1.msra.mxu0 0.0
  %709 = vmatprep.subr.mxu0 0.0
  %710 = vmatpush1.msra.mxu0 0.0
  %711 = vmatprep.subr.mxu0 0.0
  %712 = vmatpush1.msra.mxu0 0.0
  %713 = vmatprep.subr.mxu0 0.0
  %714 = vmatpush1.msra.mxu0 0.0
  %715 = vmatprep.subr.mxu0 0.0
  %716 = vmatpush1.msra.mxu0 0.0
  %717 = vmatprep.subr.mxu0 0.0
  %718 = vmatpush1.msra.mxu0 0.0
  %719 = vmatprep.subr.mxu0 0.0
  %720 = vmatpush1.msra.mxu0 0.0
  %721 = vmatprep.subr.mxu0 0.0
  %722 = vmatpush1.msra.mxu0 0.0
  %723 = vmatprep.subr.mxu0 0.0
  %724 = vmatpush1.msra.mxu0 0.0
  %725 = vmatprep.subr.mxu0 0.0
  %726 = vmatpush1.msra.mxu0 0.0
  %727 = vmatprep.subr.mxu0 0.0
  %728 = vmatpush1.msra.mxu0 1.0
  %729 = vmatprep.subr.mxu0 0.0
  %730 = vmatpush1.msra.mxu0 1.0
  %731 = vmatprep.subr.mxu0 0.0
  %732 = vmatpush2.msra.mxu0 0.0
  %733 = vmatprep.subr.mxu0 0.0
  %734 = vmatpush2.msra.mxu0 0.0
  %735 = vmatprep.subr.mxu0 0.0
  %736 = vmatpush2.msra.mxu0 0.0
  %737 = vmatprep.subr.mxu0 0.0
  %738 = vmatpush2.msra.mxu0 0.0
  %739 = vmatprep.subr.mxu0 0.0
  %740 = vmatpush2.msra.mxu0 0.0
  %741 = vmatprep.subr.mxu0 0.0
  %742 = vmatpush2.msra.mxu0 0.0
  %743 = vmatprep.subr.mxu0 0.0
  %744 = vmatpush2.msra.mxu0 0.0
  %745 = vmatprep.subr.mxu0 0.0
  %746 = vmatpush2.msra.mxu0 0.0
  %747 = vmatprep.subr.mxu0 0.0
  %748 = vmatpush2.msra.mxu0 0.0
  %749 = vmatprep.subr.mxu0 0.0
  %750 = vmatpush2.msra.mxu0 0.0
  %751 = vmatprep.subr.mxu0 0.0
  %752 = vmatpush2.msra.mxu0 0.0
  %753 = vmatprep.subr.mxu0 0.0
  %754 = vmatpush2.msra.mxu0 0.0
  %755 = vmatprep.subr.mxu0 0.0
  %756 = vmatpush2.msra.mxu0 0.0
  %757 = vmatprep.subr.mxu0 0.0
  %758 = vmatpush2.msra.mxu0 0.0
  %759 = vmatprep.subr.mxu0 0.0
  %760 = vmatpush2.msra.mxu0 0.0
  %761 = vmatprep.subr.mxu0 0.0
  %762 = vmatpush2.msra.mxu0 0.0
  %763 = vmatprep.mubr.f32.mxu0 0.0
  %v764 = vand.u32 %v479, 4294901760
  %v765 = vsub.f32 %v479, %v764
  %v766 = vand.u32 %v765, 4294901760
  %767 = vmatmul.mubr.f32.gmra.mxu0 %v766
  %v768 = vpop.f32.mrf.mxu0
  %v769 = vadd.f32 %v696, %v768
  %v770 = vpop.f32.mrf.mxu0
  %771 = vdwg.mxu0
  %772 = vmatprep.subr.mxu0 0.0
  %773 = vmatpush1.msra.mxu0 0.0
  %774 = vmatprep.subr.mxu0 0.0
  %775 = vmatpush1.msra.mxu0 0.0
  %776 = vmatprep.subr.mxu0 0.0
  %777 = vmatpush1.msra.mxu0 0.0
  %778 = vmatprep.subr.mxu0 0.0
  %779 = vmatpush1.msra.mxu0 0.0
  %780 = vmatprep.subr.mxu0 0.0
  %781 = vmatpush1.msra.mxu0 0.0
  %782 = vmatprep.subr.mxu0 0.0
  %783 = vmatpush1.msra.mxu0 0.0
  %784 = vmatprep.subr.mxu0 0.0
  %785 = vmatpush1.msra.mxu0 0.0
  %786 = vmatprep.subr.mxu0 0.0
  %787 = vmatpush1.msra.mxu0 0.0
  %788 = vmatprep.subr.mxu0 0.0
  %789 = vmatpush1.msra.mxu0 0.0
  %790 = vmatprep.subr.mxu0 0.0
  %791 = vmatpush1.msra.mxu0 0.0
  %792 = vmatprep.subr.mxu0 0.0
  %793 = vmatpush1.msra.mxu0 0.0
  %794 = vmatprep.subr.mxu0 0.0
  %795 = vmatpush1.msra.mxu0 0.0
  %796 = vmatprep.subr.mxu0 0.0
  %797 = vmatpush1.msra.mxu0 0.0
  %798 = vmatprep.subr.mxu0 0.0
  %799 = vmatpush1.msra.mxu0 0.0
  %800 = vmatprep.subr.mxu0 0.0
  %801 = vmatpush1.msra.mxu0 0.0
  %802 = vmatprep.subr.mxu0 0.0
  %803 = vmatpush1.msra.mxu0 0.0
  %804 = vmatprep.subr.mxu0 0.0
  %805 = vmatpush2.msra.mxu0 0.0
  %806 = vmatprep.subr.mxu0 0.0
  %807 = vmatpush2.msra.mxu0 0.0
  %808 = vmatprep.subr.mxu0 0.0
  %809 = vmatpush2.msra.mxu0 0.0
  %810 = vmatprep.subr.mxu0 0.0
  %811 = vmatpush2.msra.mxu0 0.0
  %812 = vmatprep.subr.mxu0 0.0
  %813 = vmatpush2.msra.mxu0 0.0
  %814 = vmatprep.subr.mxu0 0.0
  %815 = vmatpush2.msra.mxu0 0.0
  %816 = vmatprep.subr.mxu0 0.0
  %817 = vmatpush2.msra.mxu0 0.0
  %818 = vmatprep.subr.mxu0 0.0
  %819 = vmatpush2.msra.mxu0 0.0
  %820 = vmatprep.subr.mxu0 0.0
  %821 = vmatpush2.msra.mxu0 0.0
  %822 = vmatprep.subr.mxu0 0.0
  %823 = vmatpush2.msra.mxu0 0.0
  %824 = vmatprep.subr.mxu0 0.0
  %825 = vmatpush2.msra.mxu0 0.0
  %826 = vmatprep.subr.mxu0 0.0
  %827 = vmatpush2.msra.mxu0 0.0
  %828 = vmatprep.subr.mxu0 0.0
  %829 = vmatpush2.msra.mxu0 0.0
  %830 = vmatprep.subr.mxu0 0.0
  %831 = vmatpush2.msra.mxu0 0.0
  %832 = vmatprep.subr.mxu0 0.0
  %833 = vmatpush2.msra.mxu0 0.0
  %834 = vmatprep.subr.mxu0 0.0
  %835 = vmatpush2.msra.mxu0 0.0
  %836 = vmatprep.mubr.f32.mxu0 0.0
  %v837 = vand.u32 %v479, 4294901760
  %838 = vmatmul.mubr.f32.gmra.mxu0 %v837
  %v839 = vpop.f32.mrf.mxu0
  %v840 = vadd.f32 %v769, %v839
  %v841 = vpop.f32.mrf.mxu0
  %842 = vdwg.mxu0
  %843 = vmatprep.subr.mxu0 0.0
  %844 = vmatpush1.msra.mxu0 0.0
  %845 = vmatprep.subr.mxu0 0.0
  %846 = vmatpush1.msra.mxu0 0.0
  %847 = vmatprep.subr.mxu0 0.0
  %848 = vmatpush1.msra.mxu0 0.0
  %849 = vmatprep.subr.mxu0 0.0
  %850 = vmatpush1.msra.mxu0 0.0
  %851 = vmatprep.subr.mxu0 0.0
  %852 = vmatpush1.msra.mxu0 0.0
  %853 = vmatprep.subr.mxu0 0.0
  %854 = vmatpush1.msra.mxu0 0.0
  %855 = vmatprep.subr.mxu0 0.0
  %856 = vmatpush1.msra.mxu0 0.0
  %857 = vmatprep.subr.mxu0 0.0
  %858 = vmatpush1.msra.mxu0 0.0
  %859 = vmatprep.subr.mxu0 0.0
  %860 = vmatpush1.msra.mxu0 0.0
  %861 = vmatprep.subr.mxu0 0.0
  %862 = vmatpush1.msra.mxu0 0.0
  %863 = vmatprep.subr.mxu0 0.0
  %864 = vmatpush1.msra.mxu0 0.0
  %865 = vmatprep.subr.mxu0 0.0
  %866 = vmatpush1.msra.mxu0 0.0
  %867 = vmatprep.subr.mxu0 0.0
  %868 = vmatpush1.msra.mxu0 0.0
  %869 = vmatprep.subr.mxu0 0.0
  %870 = vmatpush1.msra.mxu0 0.0
  %871 = vmatprep.subr.mxu0 0.0
  %872 = vmatpush1.msra.mxu0 1.0
  %873 = vmatprep.subr.mxu0 0.0
  %874 = vmatpush1.msra.mxu0 1.0
  %875 = vmatprep.subr.mxu0 0.0
  %876 = vmatpush2.msra.mxu0 0.0
  %877 = vmatprep.subr.mxu0 0.0
  %878 = vmatpush2.msra.mxu0 0.0
  %879 = vmatprep.subr.mxu0 0.0
  %880 = vmatpush2.msra.mxu0 0.0
  %881 = vmatprep.subr.mxu0 0.0
  %882 = vmatpush2.msra.mxu0 0.0
  %883 = vmatprep.subr.mxu0 0.0
  %884 = vmatpush2.msra.mxu0 0.0
  %885 = vmatprep.subr.mxu0 0.0
  %886 = vmatpush2.msra.mxu0 0.0
  %887 = vmatprep.subr.mxu0 0.0
  %888 = vmatpush2.msra.mxu0 0.0
  %889 = vmatprep.subr.mxu0 0.0
  %890 = vmatpush2.msra.mxu0 0.0
  %891 = vmatprep.subr.mxu0 0.0
  %892 = vmatpush2.msra.mxu0 0.0
  %893 = vmatprep.subr.mxu0 0.0
  %894 = vmatpush2.msra.mxu0 0.0
  %895 = vmatprep.subr.mxu0 0.0
  %896 = vmatpush2.msra.mxu0 0.0
  %897 = vmatprep.subr.mxu0 0.0
  %898 = vmatpush2.msra.mxu0 0.0
  %899 = vmatprep.subr.mxu0 0.0
  %900 = vmatpush2.msra.mxu0 0.0
  %901 = vmatprep.subr.mxu0 0.0
  %902 = vmatpush2.msra.mxu0 0.0
  %903 = vmatprep.subr.mxu0 0.0
  %904 = vmatpush2.msra.mxu0 0.0
  %905 = vmatprep.subr.mxu0 0.0
  %906 = vmatpush2.msra.mxu0 0.0
  %907 = vmatprep.mubr.f32.mxu0 0.0
  %v908 = vand.u32 %v479, 4294901760
  %909 = vmatmul.mubr.f32.gmra.mxu0 %v908
  %v910 = vpop.f32.mrf.mxu0
  %v911 = vadd.f32 %v840, %v910
  %v912 = vpop.f32.mrf.mxu0
  %913 = vdwg.mxu0
  %v914 = vmul.f32 %v911, %v463
  %v916 = vlaneseq
  %v917 = vshrl.u32 %v916, 7
  %v918 = vsub.s32 0, %v917
  %v919 = vrot.slane %v18, %v918
  %v921 = vsel %vm469, %v919, 0.0
  %v922 = vsel %vm19, %v921, 0.0
  %923 = vadd.xlane.f32.xlu0 %v922
  %v924 = vpop.xlane.xlu0 %923
  %v925 = vsel %vm469, %v23, 0.0
  %v926 = vsel %vm19, %v925, 0.0
  %927 = vadd.xlane.f32.xlu0 %v926
  %v928 = vpop.xlane.xlu0 %927
  %v929 = vlog2.pop %v459
  %v930 = vmul.f32 %v929, 0.6931472
  %v931 = vsub.f32 %v928, %v930
  %v932 = vmul.f32 %v924, %v931
  %v933 = vsub.f32 0.0, %v932
  %v934 = vmul.f32 %v924, 9.2103405
  %v935 = vmul.f32 %v934, %v914
  %v936 = vlaneseq
  %v937 = vshrl.u32 %v936, 7
  %s938 = smul.u32 0, 8
  %v939 = vstv %s938
  %v940 = vadd.s32 %v939, %v937
  %vm941 = vcmp.lt.s32.totalorder %v940, 8
  %v942 = vsel %vm941, %v933, 0.0
  %vm943 = vcmask 7168
  %v944 = vsel %vm943, %v942, 0.0
  %v945 = vrot.slane %v944, 4
  %v946 = vadd.f32 %v944, %v945
  %v947 = vrot.slane %v946, 2
  %v948 = vadd.f32 %v946, %v947
  %v949 = vrot.slane %v948, 1
  %v950 = vadd.f32 %v948, %v949
  %v951 = vsel %vm941, %v935, 0.0
  %v952 = vsel %vm943, %v951, 0.0
  %v953 = vrot.slane %v952, 4
  %v954 = vadd.f32 %v952, %v953
  %v955 = vrot.slane %v954, 2
  %v956 = vadd.f32 %v954, %v955
  %v957 = vrot.slane %v956, 1
  %v958 = vadd.f32 %v956, %v957
  %960 = vset.pattern.permute.xlu0 0
  %961 = vperm.xlu0 %960, %v950
  %v962 = vpop.permute.xlu0 %961
  %964 = vst [vmem:[%s3] sm:$0xff] %v962
  %966 = vset.pattern.permute.xlu0 0
  %967 = vperm.xlu0 %966, %v958
  %v968 = vpop.permute.xlu0 %967
  %970 = vst [vmem:[%s4] sm:$0xff] %v968
  // Predicated region
  $region14: #{ce_and_rce.1} parent=0 // pred_check
    _
  $region15: #{ce_and_rce.1} parent=0 // pred_check_branch
    %972 = sbr.rel (0) target = $region17
  $region16: #{ce_and_rce.1} parent=0 // pred_region
    _
  $region17: #{ce_and_rce.1} parent=0 // pred_fallthru
    _
  // Predicated region
  $region18: #{ce_and_rce.1} parent=0 // pred_check
    _
  $region19: #{ce_and_rce.1} parent=0 // pred_check_branch
    %974 = sbr.rel (0) target = $region21
  $region20: #{ce_and_rce.1} parent=0 // pred_region
    _
  $region21: #{ce_and_rce.1} parent=0 // pred_fallthru
    _
  // Predicated region
  $region22: #{ce_and_rce.1} parent=0 // pred_check
    _
  $region23: #{ce_and_rce.1} parent=0 // pred_check_branch
    %976 = sbr.rel (0) target = $region25
  $region24: #{ce_and_rce.1} parent=0 // pred_region
    _
  $region25: #{ce_and_rce.1} parent=0 // pred_fallthru
    _
  // Predicated region
  $region26: #{ce_and_rce.1} parent=0 // pred_check
    _
  $region27: #{ce_and_rce.1} parent=0 // pred_check_branch
    %978 = sbr.rel (0) target = $region29
  $region28: #{ce_and_rce.1} parent=0 // pred_region
    _
  $region29: #{ce_and_rce.1} parent=0 // pred_fallthru
    _

</llo_original>
